<compile_context>
chip_gen: v6e
topology: v6e:2x2x1
jax: 0.10.0
libtpu: 0.0.40
codegen_flags: <defaults>
</compile_context>

<pallas_src>
import functools
import math

import jax
import jax.numpy as jnp
import numpy as np
from jax import lax
from jax.experimental import pallas as pl
from jax.experimental.pallas import tpu as pltpu


# ----------------------------- kernel helpers -----------------------------

def _layer_norm(x, gamma, beta, eps=1e-5):
    mean = jnp.mean(x, axis=-1, keepdims=True)
    var = jnp.mean(jnp.square(x - mean), axis=-1, keepdims=True)
    return (x - mean) * lax.rsqrt(var + eps) * gamma + beta


def _gelu_tanh(x):
    c = math.sqrt(2.0 / math.pi)
    return 0.5 * x * (1.0 + jnp.tanh(c * (x + 0.044715 * x * x * x)))


def _dot_t(a, w):
    # a: (rows, in), w: (out, in)  ->  (rows, out)   i.e.  a @ w.T
    return lax.dot_general(a, w, (((1,), (1,)), ((), ())),
                           preferred_element_type=jnp.float32)


# --------------------------------- kernel ---------------------------------

def attention_aggregator_kernel(
    x_ref,                      # (TB*N, E)  bf16 data rows for this batch tile
    cls_ref,                    # (1, E)     f32 CLS token
    w_in_ref,                   # (3E, E)    bf16 fused q/k/v in-proj weight
    b_in_ref,                   # (1, 3E)    f32 fused in-proj bias
    mt_ref,                     # (H, E)     f32 head mask, MT[h, d] = [d in head h]
    wo_ref, bo_ref,             # (E, E) bf16, (1, E) f32
    g_ref, beta_ref,            # (1, E), (1, E)  shared LayerNorm params (f32)
    w1_ref, b1_ref,             # (4E, E) bf16, (1, 4E) f32
    w2_ref, b2_ref,             # (E, 4E) bf16, (1, E) f32
    out_ref,                    # (TB, E)    f32 CLS outputs for this tile
    *, batch_tile, num_vectors, num_heads):
    TB, N, H = batch_tile, num_vectors, num_heads
    R, E = x_ref.shape
    Dh = E // H
    scale = 1.0 / math.sqrt(Dh)

    cls = cls_ref[...]                                                # (1, E) f32
    cls_b = cls.astype(w_in_ref.dtype)

    # ---- fused CLS q/k/v projection (one MXU pass, batch independent) ----
    b_in = b_in_ref[...]                                              # (1, 3E)
    qkv_c = _dot_t(cls_b, w_in_ref[...]) + b_in                       # (1, 3E) f32
    q = qkv_c[:, :E] * scale                                          # (1, E)
    k_cls = qkv_c[:, E:2 * E]                                         # (1, E)
    v_cls = qkv_c[:, 2 * E:]                                          # (1, E)

    # ---- fused K/V projection of the data rows: one dot vs W_in[E:, :] ----
    w_kv = w_in_ref[pl.ds(E, 2 * E), :]                               # (2E, E) bf16
    kv_x = _dot_t(x_ref[...], w_kv) + b_in[:, E:]                     # (R, 2E) f32
    k_x = kv_x[:, :E]                                                 # (R, E)
    v_x = kv_x[:, E:]                                                 # (R, E)

    # ---- CLS query folded into the (hoisted) head mask ----
    mt = mt_ref[...]                                                  # (H, E)
    mqt = mt * q                                                      # (H, E): q on head-h lanes
    s_x = _dot_t(k_x, mqt)                                            # (R, H)
    s_c = _dot_t(k_cls, mqt)                                          # (1, H)

    # ---- softmax over the S = N + 1 keys, per (batch, head), f32 ----
    s_x3 = s_x.reshape(TB, N, H)
    m = jnp.maximum(jnp.max(s_x3, axis=1), s_c)                       # (TB, H)
    e_x = jnp.exp(s_x3 - m[:, None, :])                               # (TB, N, H)
    e_c = jnp.exp(s_c - m)                                            # (TB, H)
    inv = pl.reciprocal(jnp.sum(e_x, axis=1) + e_c, approx=True)      # (TB, H)
    p_x = (e_x * inv[:, None, :]).reshape(R, H)                       # (R, H)
    p_c = e_c * inv                                                   # (TB, H)

    # ---- broadcast head probs across their Dh lanes, weighted value sum ----
    pf_x = jnp.dot(p_x, mt, preferred_element_type=jnp.float32)       # (R, E)
    pf_c = jnp.dot(p_c, mt, preferred_element_type=jnp.float32)       # (TB, E)
    attn = (pf_x * v_x).reshape(TB, N, E).sum(axis=1) + pf_c * v_cls  # (TB, E)

    attn = _dot_t(attn.astype(wo_ref.dtype), wo_ref[...]) + bo_ref[...]

    gamma = g_ref[...]
    beta = beta_ref[...]

    # ---- residual + LN, FFN(GELU), residual + LN -- CLS rows only ----
    h1 = _layer_norm(cls + attn, gamma, beta)                         # (TB, E)
    ff = _gelu_tanh(_dot_t(h1.astype(w1_ref.dtype), w1_ref[...]) + b1_ref[...])
    ff = _dot_t(ff.astype(w2_ref.dtype), w2_ref[...]) + b2_ref[...]   # (TB, E)
    h2 = _layer_norm(h1 + ff, gamma, beta)                            # (TB, E)

    out_ref[...] = h2.astype(out_ref.dtype)


# -------------------------------- wrapper ---------------------------------

def _vmem_limit_bytes():
    cap = 64 * 1024 * 1024          # conservative fallback (v7x-sized)
    try:
        cap = int(pltpu.get_tpu_info().vmem_capacity_bytes)
    except Exception:
        pass
    # Leave headroom for compiler scratch; never exceed 96 MiB scoped.
    return min(cap * 3 // 4, 96 * 1024 * 1024)


def _pick_batch_tile(B, N, E, x_itemsize, vmem_budget, param_bytes, max_tb=None):
    # Per-batch-element VMEM per step: x slab (double-buffered) + f32 slabs
    # for the kv projection / probs / weighted values, plus CLS-row activations.
    per_b = N * E * x_itemsize * 2      # x tile, 2 pipeline buffers
    per_b += N * (2 * E) * 4            # kv_x projection slab
    per_b += N * E * 4 * 2              # prob-expansion / weighted-value temporaries
    per_b += 8 * E * 4                  # CLS-row activations (attn, h1, ff, ...)
    budget = max(vmem_budget - param_bytes - (2 << 20), per_b)

    cands = [tb for tb in range(1, B + 1)
             if B % tb == 0 and (tb % 8 == 0 or tb == B)]
    if max_tb is not None:
        limited = [tb for tb in cands if tb <= max_tb]
        cands = limited if limited else [min(cands)]
    fitting = [tb for tb in cands if tb * per_b <= budget] or [min(cands)]
    # Prefer the largest tile that still leaves >= 2 grid steps so the
    # "parallel" axis can shard across both v7x TensorCores.
    multi = [tb for tb in fitting if B // tb >= 2]
    return max(multi) if multi else max(fitting)


def attention_aggregator(x, params, num_heads=4, max_batch_tile=None):
    B, N, E = x.shape
    H = num_heads
    assert E % H == 0, "embed_dim must be divisible by num_heads"
    Dh = E // H

    compute_dtype = jnp.bfloat16

    # Hoisted head mask (transposed): MT[h, d] = 1 iff feature lane d is in head h.
    mt = jnp.asarray(
        (np.arange(E)[None, :] // Dh == np.arange(H)[:, None]).astype(np.float32))

    w_in, b_in = params["w_in"], params["b_in"]
    reps = [
        params["cls_token"].reshape(1, E).astype(jnp.float32),
        w_in.astype(compute_dtype),                      # fused (3E, E) in-proj
        b_in.astype(jnp.float32),                        # fused (1, 3E) bias
        mt,
        params["w_out"].astype(compute_dtype), params["b_out"].astype(jnp.float32),
        params["ln_g"].astype(jnp.float32), params["ln_b"].astype(jnp.float32),
        params["w1"].astype(compute_dtype), params["b1"].astype(jnp.float32),
        params["w2"].astype(compute_dtype), params["b2"].astype(jnp.float32),
    ]
    param_bytes = sum(int(np.prod(a.shape)) * a.dtype.itemsize for a in reps)

    vmem_limit = _vmem_limit_bytes()
    TB = _pick_batch_tile(B, N, E, jnp.dtype(compute_dtype).itemsize,
                          vmem_limit, param_bytes, max_tb=max_batch_tile)

    x2d = x.reshape(B * N, E).astype(compute_dtype)      # 2-D, bf16 slab

    def rep_spec(a):
        zeros = (0,) * a.ndim
        idx = lambda b, _z=zeros: _z
        try:
            # Single-buffer grid-invariant parameters (constant index_map).
            return pl.BlockSpec(a.shape, idx, pipeline_mode=pl.Buffered(1))
        except TypeError:
            # TODO(synk): older jax without BlockSpec.pipeline_mode.
            return pl.BlockSpec(a.shape, idx)

    kernel = functools.partial(attention_aggregator_kernel,
                               batch_tile=TB, num_vectors=N, num_heads=H)

    flops = int(
        2 * B * N * E * (2 * E)            # fused K/V projection of data rows
        + 2 * B * N * E * H * 2            # scores + head-prob expansion
        + 2 * B * E * E                    # out projection (CLS rows)
        + 2 * B * E * (4 * E) * 2          # FFN
        + (B // TB) * 2 * E * (3 * E)      # CLS q/k/v per grid step
    )
    transcendentals = int(B * (N + 1) * H + B * 4 * E)
    bytes_accessed = int(x2d.size * x2d.dtype.itemsize + B * E * 4 + param_bytes)

    out = pl.pallas_call(
        kernel,
        out_shape=jax.ShapeDtypeStruct((B, E), jnp.float32),
        grid=(B // TB,),
        in_specs=[pl.BlockSpec((TB * N, E), lambda b: (b, 0))]
                 + [rep_spec(a) for a in reps],
        out_specs=pl.BlockSpec((TB, E), lambda b: (b, 0)),
        compiler_params=pltpu.CompilerParams(
            dimension_semantics=("parallel",),
            vmem_limit_bytes=int(vmem_limit)),
        cost_estimate=pl.CostEstimate(
            flops=flops, transcendentals=transcendentals,
            bytes_accessed=bytes_accessed),
    )(x2d, *reps)
    return out                                                        # (B, E)


# ---------------------------- pure-JAX reference ---------------------------
# Full (all-rows, all-S-keys) f32 forward, CLS row taken at the end -- validates
# that the CLS-only kernel restructuring is mathematically equivalent.

def reference(x, params, num_heads=4):
    B, N, E = x.shape
    H = num_heads
    Dh = E // H
    cls = jnp.broadcast_to(params["cls_token"].reshape(1, 1, E), (B, 1, E))
    xc = jnp.concatenate([cls, x], axis=1)
    qkv = jnp.einsum("bse,fe->bsf", xc, params["w_in"]) + params["b_in"][0]
    q, k, v = qkv[..., :E], qkv[..., E:2 * E], qkv[..., 2 * E:]

    def split(t):
        return t.reshape(B, -1, H, Dh).transpose(0, 2, 1, 3)

    qh, kh, vh = split(q), split(k), split(v)
    scores = jnp.einsum("bhqd,bhkd->bhqk", qh, kh) / math.sqrt(Dh)
    p = jax.nn.softmax(scores, axis=-1)
    o = jnp.einsum("bhqk,bhkd->bhqd", p, vh).transpose(0, 2, 1, 3).reshape(B, -1, E)
    attn = jnp.einsum("bse,fe->bsf", o, params["w_out"]) + params["b_out"][0]

    def ln(t):
        m = t.mean(-1, keepdims=True)
        var = ((t - m) ** 2).mean(-1, keepdims=True)
        return (t - m) / jnp.sqrt(var + 1e-5) * params["ln_g"][0] + params["ln_b"][0]

    h1 = ln(xc + attn)
    ff = jnp.einsum("bse,fe->bsf", h1, params["w1"]) + params["b1"][0]
    c = math.sqrt(2.0 / math.pi)
    ff = 0.5 * ff * (1.0 + jnp.tanh(c * (ff + 0.044715 * ff ** 3)))
    ff = jnp.einsum("bsf,ef->bse", ff, params["w2"]) + params["b2"][0]
    h2 = ln(h1 + ff)
    return h2[:, 0, :]


# ----------------------------------- main -----------------------------------

if __name__ == "__main__":
    B, N, E, H = 2, 8, 32, 4
    key = jax.random.PRNGKey(0)
    ks = jax.random.split(key, 10)
    params = {
        "cls_token": jax.random.normal(ks[0], (1, 1, E), jnp.float32),
        "w_in":  0.1 * jax.random.normal(ks[1], (3 * E, E), jnp.float32),
        "b_in":  0.01 * jax.random.normal(ks[2], (1, 3 * E), jnp.float32),
        "w_out": 0.1 * jax.random.normal(ks[3], (E, E), jnp.float32),
        "b_out": 0.01 * jax.random.normal(ks[4], (1, E), jnp.float32),
        "ln_g":  jnp.ones((1, E), jnp.float32),    # nn.LayerNorm default init
        "ln_b":  jnp.zeros((1, E), jnp.float32),
        "w1":    0.1 * jax.random.normal(ks[5], (4 * E, E), jnp.float32),
        "b1":    0.01 * jax.random.normal(ks[6], (1, 4 * E), jnp.float32),
        "w2":    0.1 * jax.random.normal(ks[7], (E, 4 * E), jnp.float32),
        "b2":    0.01 * jax.random.normal(ks[8], (1, E), jnp.float32),
    }
    x = jax.random.normal(ks[9], (B, N, E), jnp.float32)

    # bf16 operands => looser tolerance than the pure-f32 variant.
    TOL = 3e-2

    # Config 1: tiny batch (TB = B, single grid step).
    out = jax.block_until_ready(attention_aggregator(x, params, num_heads=H))
    assert out.shape == (B, E)
    ref = reference(x, params, num_heads=H)
    np.testing.assert_allclose(np.asarray(out), np.asarray(ref),
                               rtol=TOL, atol=TOL)

    # Config 2: batch tiling with multiple grid steps (picker chooses TB=8, grid=2).
    B2 = 16
    x2 = jax.random.normal(jax.random.PRNGKey(1), (B2, N, E), jnp.float32)
    out2 = jax.block_until_ready(attention_aggregator(x2, params, num_heads=H))
    assert out2.shape == (B2, E)
    ref2 = reference(x2, params, num_heads=H)
    np.testing.assert_allclose(np.asarray(out2), np.asarray(ref2),
                               rtol=TOL, atol=TOL)

    print("KERNEL_OK")
</pallas_src>

<mosaic_0001>
module attributes {stable_mosaic.version = 11 : i64} {
  func.func @attention_aggregator_kernel(%arg0: i32, %arg1: memref<16x32xbf16, #tpu.memory_space<vmem>>, %arg2: memref<1x32xf32, #tpu.memory_space<vmem>>, %arg3: memref<96x32xbf16, #tpu.memory_space<vmem>>, %arg4: memref<1x96xf32, #tpu.memory_space<vmem>>, %arg5: memref<4x32xf32, #tpu.memory_space<vmem>>, %arg6: memref<32x32xbf16, #tpu.memory_space<vmem>>, %arg7: memref<1x32xf32, #tpu.memory_space<vmem>>, %arg8: memref<1x32xf32, #tpu.memory_space<vmem>>, %arg9: memref<1x32xf32, #tpu.memory_space<vmem>>, %arg10: memref<128x32xbf16, #tpu.memory_space<vmem>>, %arg11: memref<1x128xf32, #tpu.memory_space<vmem>>, %arg12: memref<32x128xbf16, #tpu.memory_space<vmem>>, %arg13: memref<1x32xf32, #tpu.memory_space<vmem>>, %arg14: memref<2x32xf32, #tpu.memory_space<vmem>>) attributes {dimension_semantics = [#tpu.dimension_semantics<parallel>], iteration_bounds = array<i64: 1>, scalar_prefetch = 0 : i64, scratch_operands = 0 : i64, tpu.core_type = #tpu.core_type<tc>, window_params = [{transform_indices = @transform_0, window_bounds = array<i64: 16, 32>}, {pipeline_mode = #tpu.pipeline_mode<synchronous>, transform_indices = @transform_1, window_bounds = array<i64: 1, 32>}, {pipeline_mode = #tpu.pipeline_mode<synchronous>, transform_indices = @transform_2, window_bounds = array<i64: 96, 32>}, {pipeline_mode = #tpu.pipeline_mode<synchronous>, transform_indices = @transform_3, window_bounds = array<i64: 1, 96>}, {pipeline_mode = #tpu.pipeline_mode<synchronous>, transform_indices = @transform_4, window_bounds = array<i64: 4, 32>}, {pipeline_mode = #tpu.pipeline_mode<synchronous>, transform_indices = @transform_5, window_bounds = array<i64: 32, 32>}, {pipeline_mode = #tpu.pipeline_mode<synchronous>, transform_indices = @transform_6, window_bounds = array<i64: 1, 32>}, {pipeline_mode = #tpu.pipeline_mode<synchronous>, transform_indices = @transform_7, window_bounds = array<i64: 1, 32>}, {pipeline_mode = #tpu.pipeline_mode<synchronous>, transform_indices = @transform_8, window_bounds = array<i64: 1, 32>}, {pipeline_mode = #tpu.pipeline_mode<synchronous>, transform_indices = @transform_9, window_bounds = array<i64: 128, 32>}, {pipeline_mode = #tpu.pipeline_mode<synchronous>, transform_indices = @transform_10, window_bounds = array<i64: 1, 128>}, {pipeline_mode = #tpu.pipeline_mode<synchronous>, transform_indices = @transform_11, window_bounds = array<i64: 32, 128>}, {pipeline_mode = #tpu.pipeline_mode<synchronous>, transform_indices = @transform_12, window_bounds = array<i64: 1, 32>}, {transform_indices = @transform_13, window_bounds = array<i64: 2, 32>}]} {
    %c0 = arith.constant 0 : index
    %c0_0 = arith.constant 0 : index
    %0 = vector.load %arg2[%c0, %c0_0] : memref<1x32xf32, #tpu.memory_space<vmem>>, vector<1x32xf32>
    %1 = arith.truncf %0 : vector<1x32xf32> to vector<1x32xbf16>
    %c0_1 = arith.constant 0 : index
    %c0_2 = arith.constant 0 : index
    %2 = vector.load %arg4[%c0_1, %c0_2] : memref<1x96xf32, #tpu.memory_space<vmem>>, vector<1x96xf32>
    %c0_3 = arith.constant 0 : index
    %c0_4 = arith.constant 0 : index
    %3 = vector.load %arg3[%c0_3, %c0_4] : memref<96x32xbf16, #tpu.memory_space<vmem>>, vector<96x32xbf16>
    %cst = arith.constant dense<0.000000e+00> : vector<1x96xf32>
    %4 = tpu.matmul %1, %3, %cst {dimension_numbers = #tpu.dot_dimension_numbers<[1], [1], [0], [0], [0, 0, 1, 0], [], []>} : vector<1x32xbf16>, vector<96x32xbf16>, vector<1x96xf32> -> vector<1x96xf32>
    %5 = arith.addf %4, %2 : vector<1x96xf32>
    %6 = vector.extract_strided_slice %5 {offsets = [0, 0], sizes = [1, 32], strides = [1, 1]} : vector<1x96xf32> to vector<1x32xf32>
    %cst_5 = arith.constant 0.353553385 : f32
    %7 = vector.broadcast %cst_5 : f32 to vector<1x32xf32>
    %8 = arith.mulf %6, %7 : vector<1x32xf32>
    %9 = vector.extract_strided_slice %5 {offsets = [0, 32], sizes = [1, 32], strides = [1, 1]} : vector<1x96xf32> to vector<1x32xf32>
    %10 = vector.extract_strided_slice %5 {offsets = [0, 64], sizes = [1, 32], strides = [1, 1]} : vector<1x96xf32> to vector<1x32xf32>
    %c32 = arith.constant 32 : index
    %c0_6 = arith.constant 0 : index
    %11 = vector.load %arg3[%c32, %c0_6] : memref<96x32xbf16, #tpu.memory_space<vmem>>, vector<64x32xbf16>
    %c0_7 = arith.constant 0 : index
    %c0_8 = arith.constant 0 : index
    %12 = vector.load %arg1[%c0_7, %c0_8] : memref<16x32xbf16, #tpu.memory_space<vmem>>, vector<16x32xbf16>
    %cst_9 = arith.constant dense<0.000000e+00> : vector<16x64xf32>
    %13 = tpu.matmul %12, %11, %cst_9 {dimension_numbers = #tpu.dot_dimension_numbers<[1], [1], [0], [0], [0, 0, 1, 0], [], []>} : vector<16x32xbf16>, vector<64x32xbf16>, vector<16x64xf32> -> vector<16x64xf32>
    %14 = vector.extract_strided_slice %2 {offsets = [0, 32], sizes = [1, 64], strides = [1, 1]} : vector<1x96xf32> to vector<1x64xf32>
    %15 = vector.broadcast %14 : vector<1x64xf32> to vector<16x64xf32>
    %16 = arith.addf %13, %15 : vector<16x64xf32>
    %17 = vector.extract_strided_slice %16 {offsets = [0, 0], sizes = [16, 32], strides = [1, 1]} : vector<16x64xf32> to vector<16x32xf32>
    %18 = vector.extract_strided_slice %16 {offsets = [0, 32], sizes = [16, 32], strides = [1, 1]} : vector<16x64xf32> to vector<16x32xf32>
    %c0_10 = arith.constant 0 : index
    %c0_11 = arith.constant 0 : index
    %19 = vector.load %arg5[%c0_10, %c0_11] : memref<4x32xf32, #tpu.memory_space<vmem>>, vector<4x32xf32>
    %20 = vector.broadcast %8 : vector<1x32xf32> to vector<4x32xf32>
    %21 = arith.mulf %19, %20 : vector<4x32xf32>
    %cst_12 = arith.constant dense<0.000000e+00> : vector<16x4xf32>
    %22 = tpu.matmul %17, %21, %cst_12 {dimension_numbers = #tpu.dot_dimension_numbers<[1], [1], [0], [0], [0, 0, 1, 0], [], []>} : vector<16x32xf32>, vector<4x32xf32>, vector<16x4xf32> -> vector<16x4xf32>
    %cst_13 = arith.constant dense<0.000000e+00> : vector<1x4xf32>
    %23 = tpu.matmul %9, %21, %cst_13 {dimension_numbers = #tpu.dot_dimension_numbers<[1], [1], [0], [0], [0, 0, 1, 0], [], []>} : vector<1x32xf32>, vector<4x32xf32>, vector<1x4xf32> -> vector<1x4xf32>
    %24 = vector.shape_cast %22 : vector<16x4xf32> to vector<2x8x4xf32>
    %cst_14 = arith.constant dense<0xFF800000> : vector<2x4xf32>
    %25 = vector.multi_reduction <maximumf>, %24, %cst_14 [1] : vector<2x8x4xf32> to vector<2x4xf32>
    %26 = vector.broadcast %23 : vector<1x4xf32> to vector<2x4xf32>
    %27 = arith.maximumf %25, %26 : vector<2x4xf32>
    %28 = vector.shape_cast %27 : vector<2x4xf32> to vector<2x1x4xf32>
    %29 = vector.broadcast %28 : vector<2x1x4xf32> to vector<2x8x4xf32>
    %30 = arith.subf %24, %29 : vector<2x8x4xf32>
    %31 = math.exp %30 : vector<2x8x4xf32>
    %32 = vector.broadcast %23 : vector<1x4xf32> to vector<2x4xf32>
    %33 = arith.subf %32, %27 : vector<2x4xf32>
    %34 = math.exp %33 : vector<2x4xf32>
    %cst_15 = arith.constant dense<0.000000e+00> : vector<2x4xf32>
    %35 = vector.multi_reduction <add>, %31, %cst_15 [1] : vector<2x8x4xf32> to vector<2x4xf32>
    %36 = arith.addf %35, %34 : vector<2x4xf32>
    %37 = tpu.reciprocal %36 {approx = true} : vector<2x4xf32> -> vector<2x4xf32>
    %38 = vector.shape_cast %37 : vector<2x4xf32> to vector<2x1x4xf32>
    %39 = vector.broadcast %38 : vector<2x1x4xf32> to vector<2x8x4xf32>
    %40 = arith.mulf %31, %39 : vector<2x8x4xf32>
    %41 = vector.shape_cast %40 : vector<2x8x4xf32> to vector<16x4xf32>
    %42 = arith.mulf %34, %37 : vector<2x4xf32>
    %cst_16 = arith.constant dense<0.000000e+00> : vector<16x32xf32>
    %43 = tpu.matmul %41, %19, %cst_16 {dimension_numbers = #tpu.dot_dimension_numbers<[1], [0], [0], [1], [0, 0, 1, 1], [], []>} : vector<16x4xf32>, vector<4x32xf32>, vector<16x32xf32> -> vector<16x32xf32>
    %cst_17 = arith.constant dense<0.000000e+00> : vector<2x32xf32>
    %44 = tpu.matmul %42, %19, %cst_17 {dimension_numbers = #tpu.dot_dimension_numbers<[1], [0], [0], [1], [0, 0, 1, 1], [], []>} : vector<2x4xf32>, vector<4x32xf32>, vector<2x32xf32> -> vector<2x32xf32>
    %45 = arith.mulf %43, %18 : vector<16x32xf32>
    %46 = vector.shape_cast %45 : vector<16x32xf32> to vector<2x8x32xf32>
    %cst_18 = arith.constant dense<0.000000e+00> : vector<2x32xf32>
    %47 = vector.multi_reduction <add>, %46, %cst_18 [1] : vector<2x8x32xf32> to vector<2x32xf32>
    %48 = vector.broadcast %10 : vector<1x32xf32> to vector<2x32xf32>
    %49 = arith.mulf %44, %48 : vector<2x32xf32>
    %50 = arith.addf %47, %49 : vector<2x32xf32>
    %51 = arith.truncf %50 : vector<2x32xf32> to vector<2x32xbf16>
    %c0_19 = arith.constant 0 : index
    %c0_20 = arith.constant 0 : index
    %52 = vector.load %arg6[%c0_19, %c0_20] : memref<32x32xbf16, #tpu.memory_space<vmem>>, vector<32x32xbf16>
    %cst_21 = arith.constant dense<0.000000e+00> : vector<2x32xf32>
    %53 = tpu.matmul %51, %52, %cst_21 {dimension_numbers = #tpu.dot_dimension_numbers<[1], [1], [0], [0], [0, 0, 1, 0], [], []>} : vector<2x32xbf16>, vector<32x32xbf16>, vector<2x32xf32> -> vector<2x32xf32>
    %c0_22 = arith.constant 0 : index
    %c0_23 = arith.constant 0 : index
    %54 = vector.load %arg7[%c0_22, %c0_23] : memref<1x32xf32, #tpu.memory_space<vmem>>, vector<1x32xf32>
    %55 = vector.broadcast %54 : vector<1x32xf32> to vector<2x32xf32>
    %56 = arith.addf %53, %55 : vector<2x32xf32>
    %c0_24 = arith.constant 0 : index
    %c0_25 = arith.constant 0 : index
    %57 = vector.load %arg8[%c0_24, %c0_25] : memref<1x32xf32, #tpu.memory_space<vmem>>, vector<1x32xf32>
    %c0_26 = arith.constant 0 : index
    %c0_27 = arith.constant 0 : index
    %58 = vector.load %arg9[%c0_26, %c0_27] : memref<1x32xf32, #tpu.memory_space<vmem>>, vector<1x32xf32>
    %59 = vector.broadcast %0 : vector<1x32xf32> to vector<2x32xf32>
    %60 = arith.addf %59, %56 : vector<2x32xf32>
    %cst_28 = arith.constant dense<0.000000e+00> : vector<2xf32>
    %61 = vector.multi_reduction <add>, %60, %cst_28 [1] : vector<2x32xf32> to vector<2xf32>
    %62 = vector.shape_cast %61 : vector<2xf32> to vector<2x1xf32>
    %cst_29 = arith.constant 3.200000e+01 : f32
    %63 = vector.broadcast %cst_29 : f32 to vector<2x1xf32>
    %64 = arith.divf %62, %63 : vector<2x1xf32>
    %65 = vector.broadcast %64 : vector<2x1xf32> to vector<2x32xf32>
    %66 = arith.subf %60, %65 : vector<2x32xf32>
    %67 = arith.mulf %66, %66 : vector<2x32xf32>
    %cst_30 = arith.constant dense<0.000000e+00> : vector<2xf32>
    %68 = vector.multi_reduction <add>, %67, %cst_30 [1] : vector<2x32xf32> to vector<2xf32>
    %69 = vector.shape_cast %68 : vector<2xf32> to vector<2x1xf32>
    %cst_31 = arith.constant 3.200000e+01 : f32
    %70 = vector.broadcast %cst_31 : f32 to vector<2x1xf32>
    %71 = arith.divf %69, %70 : vector<2x1xf32>
    %72 = vector.broadcast %64 : vector<2x1xf32> to vector<2x32xf32>
    %73 = arith.subf %60, %72 : vector<2x32xf32>
    %cst_32 = arith.constant 9.99999974E-6 : f32
    %74 = vector.broadcast %cst_32 : f32 to vector<2x1xf32>
    %75 = arith.addf %71, %74 : vector<2x1xf32>
    %76 = math.rsqrt %75 : vector<2x1xf32>
    %77 = vector.broadcast %76 : vector<2x1xf32> to vector<2x32xf32>
    %78 = arith.mulf %73, %77 : vector<2x32xf32>
    %79 = vector.broadcast %57 : vector<1x32xf32> to vector<2x32xf32>
    %80 = arith.mulf %78, %79 : vector<2x32xf32>
    %81 = vector.broadcast %58 : vector<1x32xf32> to vector<2x32xf32>
    %82 = arith.addf %80, %81 : vector<2x32xf32>
    %83 = arith.truncf %82 : vector<2x32xf32> to vector<2x32xbf16>
    %c0_33 = arith.constant 0 : index
    %c0_34 = arith.constant 0 : index
    %84 = vector.load %arg10[%c0_33, %c0_34] : memref<128x32xbf16, #tpu.memory_space<vmem>>, vector<128x32xbf16>
    %cst_35 = arith.constant dense<0.000000e+00> : vector<2x128xf32>
    %85 = tpu.matmul %83, %84, %cst_35 {dimension_numbers = #tpu.dot_dimension_numbers<[1], [1], [0], [0], [0, 0, 1, 0], [], []>} : vector<2x32xbf16>, vector<128x32xbf16>, vector<2x128xf32> -> vector<2x128xf32>
    %c0_36 = arith.constant 0 : index
    %c0_37 = arith.constant 0 : index
    %86 = vector.load %arg11[%c0_36, %c0_37] : memref<1x128xf32, #tpu.memory_space<vmem>>, vector<1x128xf32>
    %87 = vector.broadcast %86 : vector<1x128xf32> to vector<2x128xf32>
    %88 = arith.addf %85, %87 : vector<2x128xf32>
    %cst_38 = arith.constant 5.000000e-01 : f32
    %89 = vector.broadcast %cst_38 : f32 to vector<2x128xf32>
    %90 = arith.mulf %89, %88 : vector<2x128xf32>
    %cst_39 = arith.constant 4.471500e-02 : f32
    %91 = vector.broadcast %cst_39 : f32 to vector<2x128xf32>
    %92 = arith.mulf %91, %88 : vector<2x128xf32>
    %93 = arith.mulf %92, %88 : vector<2x128xf32>
    %94 = arith.mulf %93, %88 : vector<2x128xf32>
    %95 = arith.addf %88, %94 : vector<2x128xf32>
    %cst_40 = arith.constant 0.797884583 : f32
    %96 = vector.broadcast %cst_40 : f32 to vector<2x128xf32>
    %97 = arith.mulf %96, %95 : vector<2x128xf32>
    %98 = math.tanh %97 : vector<2x128xf32>
    %cst_41 = arith.constant 1.000000e+00 : f32
    %99 = vector.broadcast %cst_41 : f32 to vector<2x128xf32>
    %100 = arith.addf %99, %98 : vector<2x128xf32>
    %101 = arith.mulf %90, %100 : vector<2x128xf32>
    %102 = arith.truncf %101 : vector<2x128xf32> to vector<2x128xbf16>
    %c0_42 = arith.constant 0 : index
    %c0_43 = arith.constant 0 : index
    %103 = vector.load %arg12[%c0_42, %c0_43] : memref<32x128xbf16, #tpu.memory_space<vmem>>, vector<32x128xbf16>
    %cst_44 = arith.constant dense<0.000000e+00> : vector<2x32xf32>
    %104 = tpu.matmul %102, %103, %cst_44 {dimension_numbers = #tpu.dot_dimension_numbers<[1], [1], [0], [0], [0, 0, 1, 0], [], []>} : vector<2x128xbf16>, vector<32x128xbf16>, vector<2x32xf32> -> vector<2x32xf32>
    %c0_45 = arith.constant 0 : index
    %c0_46 = arith.constant 0 : index
    %105 = vector.load %arg13[%c0_45, %c0_46] : memref<1x32xf32, #tpu.memory_space<vmem>>, vector<1x32xf32>
    %106 = vector.broadcast %105 : vector<1x32xf32> to vector<2x32xf32>
    %107 = arith.addf %104, %106 : vector<2x32xf32>
    %108 = arith.addf %82, %107 : vector<2x32xf32>
    %cst_47 = arith.constant dense<0.000000e+00> : vector<2xf32>
    %109 = vector.multi_reduction <add>, %108, %cst_47 [1] : vector<2x32xf32> to vector<2xf32>
    %110 = vector.shape_cast %109 : vector<2xf32> to vector<2x1xf32>
    %cst_48 = arith.constant 3.200000e+01 : f32
    %111 = vector.broadcast %cst_48 : f32 to vector<2x1xf32>
    %112 = arith.divf %110, %111 : vector<2x1xf32>
    %113 = vector.broadcast %112 : vector<2x1xf32> to vector<2x32xf32>
    %114 = arith.subf %108, %113 : vector<2x32xf32>
    %115 = arith.mulf %114, %114 : vector<2x32xf32>
    %cst_49 = arith.constant dense<0.000000e+00> : vector<2xf32>
    %116 = vector.multi_reduction <add>, %115, %cst_49 [1] : vector<2x32xf32> to vector<2xf32>
    %117 = vector.shape_cast %116 : vector<2xf32> to vector<2x1xf32>
    %cst_50 = arith.constant 3.200000e+01 : f32
    %118 = vector.broadcast %cst_50 : f32 to vector<2x1xf32>
    %119 = arith.divf %117, %118 : vector<2x1xf32>
    %120 = vector.broadcast %112 : vector<2x1xf32> to vector<2x32xf32>
    %121 = arith.subf %108, %120 : vector<2x32xf32>
    %cst_51 = arith.constant 9.99999974E-6 : f32
    %122 = vector.broadcast %cst_51 : f32 to vector<2x1xf32>
    %123 = arith.addf %119, %122 : vector<2x1xf32>
    %124 = math.rsqrt %123 : vector<2x1xf32>
    %125 = vector.broadcast %124 : vector<2x1xf32> to vector<2x32xf32>
    %126 = arith.mulf %121, %125 : vector<2x32xf32>
    %127 = vector.broadcast %57 : vector<1x32xf32> to vector<2x32xf32>
    %128 = arith.mulf %126, %127 : vector<2x32xf32>
    %129 = vector.broadcast %58 : vector<1x32xf32> to vector<2x32xf32>
    %130 = arith.addf %128, %129 : vector<2x32xf32>
    %c0_52 = arith.constant 0 : index
    %c0_53 = arith.constant 0 : index
    %131 = vector.load %arg14[%c0_52, %c0_53] : memref<2x32xf32, #tpu.memory_space<vmem>>, vector<2x32xf32>
    tpu.vector_store %arg14[%c0_52, %c0_53], %130 {strides = array<i32>} : memref<2x32xf32, #tpu.memory_space<vmem>>, vector<2x32xf32>,
    return
  }
  func.func @transform_0(%arg0: i32) -> (i32, i32) {
    %c0_i32 = arith.constant 0 : i32
    %c0_i32_0 = arith.constant 0 : i32
    return %arg0, %c0_i32 : i32, i32
  }
  func.func @transform_1(%arg0: i32) -> (i32, i32) {
    %c0_i32 = arith.constant 0 : i32
    %c0_i32_0 = arith.constant 0 : i32
    %c0_i32_1 = arith.constant 0 : i32
    return %c0_i32, %c0_i32_0 : i32, i32
  }
  func.func @transform_2(%arg0: i32) -> (i32, i32) {
    %c0_i32 = arith.constant 0 : i32
    %c0_i32_0 = arith.constant 0 : i32
    %c0_i32_1 = arith.constant 0 : i32
    return %c0_i32, %c0_i32_0 : i32, i32
  }
  func.func @transform_3(%arg0: i32) -> (i32, i32) {
    %c0_i32 = arith.constant 0 : i32
    %c0_i32_0 = arith.constant 0 : i32
    %c0_i32_1 = arith.constant 0 : i32
    return %c0_i32, %c0_i32_0 : i32, i32
  }
  func.func @transform_4(%arg0: i32) -> (i32, i32) {
    %c0_i32 = arith.constant 0 : i32
    %c0_i32_0 = arith.constant 0 : i32
    %c0_i32_1 = arith.constant 0 : i32
    return %c0_i32, %c0_i32_0 : i32, i32
  }
  func.func @transform_5(%arg0: i32) -> (i32, i32) {
    %c0_i32 = arith.constant 0 : i32
    %c0_i32_0 = arith.constant 0 : i32
    %c0_i32_1 = arith.constant 0 : i32
    return %c0_i32, %c0_i32_0 : i32, i32
  }
  func.func @transform_6(%arg0: i32) -> (i32, i32) {
    %c0_i32 = arith.constant 0 : i32
    %c0_i32_0 = arith.constant 0 : i32
    %c0_i32_1 = arith.constant 0 : i32
    return %c0_i32, %c0_i32_0 : i32, i32
  }
  func.func @transform_7(%arg0: i32) -> (i32, i32) {
    %c0_i32 = arith.constant 0 : i32
    %c0_i32_0 = arith.constant 0 : i32
    %c0_i32_1 = arith.constant 0 : i32
    return %c0_i32, %c0_i32_0 : i32, i32
  }
  func.func @transform_8(%arg0: i32) -> (i32, i32) {
    %c0_i32 = arith.constant 0 : i32
    %c0_i32_0 = arith.constant 0 : i32
    %c0_i32_1 = arith.constant 0 : i32
    return %c0_i32, %c0_i32_0 : i32, i32
  }
  func.func @transform_9(%arg0: i32) -> (i32, i32) {
    %c0_i32 = arith.constant 0 : i32
    %c0_i32_0 = arith.constant 0 : i32
    %c0_i32_1 = arith.constant 0 : i32
    return %c0_i32, %c0_i32_0 : i32, i32
  }
  func.func @transform_10(%arg0: i32) -> (i32, i32) {
    %c0_i32 = arith.constant 0 : i32
    %c0_i32_0 = arith.constant 0 : i32
    %c0_i32_1 = arith.constant 0 : i32
    return %c0_i32, %c0_i32_0 : i32, i32
  }
  func.func @transform_11(%arg0: i32) -> (i32, i32) {
    %c0_i32 = arith.constant 0 : i32
    %c0_i32_0 = arith.constant 0 : i32
    %c0_i32_1 = arith.constant 0 : i32
    return %c0_i32, %c0_i32_0 : i32, i32
  }
  func.func @transform_12(%arg0: i32) -> (i32, i32) {
    %c0_i32 = arith.constant 0 : i32
    %c0_i32_0 = arith.constant 0 : i32
    %c0_i32_1 = arith.constant 0 : i32
    return %c0_i32, %c0_i32_0 : i32, i32
  }
  func.func @transform_13(%arg0: i32) -> (i32, i32) {
    %c0_i32 = arith.constant 0 : i32
    %c0_i32_0 = arith.constant 0 : i32
    return %arg0, %c0_i32 : i32, i32
  }
}

</mosaic_0001>

<llo_original>
// kernel: tpu_custom_call.1
$region0: #{tpu_custom_call.1}
  #allocation0 [shape = 'u32[]', space=smem, size = 0x4, offset = 0x4, fixed_abs, tag = 'smem constant byte address 0x4 - core index']
  #allocation1 [shape = 'u32[144,128]{1,0:T(1,128)}', space=vmem, size = 0x12000, scoped, tag = 'internal scratch']
  %s0 = inlined_call_operand.vmem [shape: bf16[16,32], index: 0, kind: input, shape index: {}]
  %s1 = inlined_call_operand.vmem [shape: f32[1,32], index: 1, kind: input, shape index: {}]
  %s2 = inlined_call_operand.vmem [shape: bf16[96,32], index: 2, kind: input, shape index: {}]
  %s3 = inlined_call_operand.vmem [shape: f32[1,96], index: 3, kind: input, shape index: {}]
  %s4 = inlined_call_operand.vmem [shape: f32[4,32], index: 4, kind: input, shape index: {}]
  %s5 = inlined_call_operand.vmem [shape: bf16[32,32], index: 5, kind: input, shape index: {}]
  %s6 = inlined_call_operand.vmem [shape: f32[1,32], index: 6, kind: input, shape index: {}]
  %s7 = inlined_call_operand.vmem [shape: f32[1,32], index: 7, kind: input, shape index: {}]
  %s8 = inlined_call_operand.vmem [shape: f32[1,32], index: 8, kind: input, shape index: {}]
  %s9 = inlined_call_operand.vmem [shape: bf16[128,32], index: 9, kind: input, shape index: {}]
  %s10 = inlined_call_operand.vmem [shape: f32[1,128], index: 10, kind: input, shape index: {}]
  %s11 = inlined_call_operand.vmem [shape: bf16[32,128], index: 11, kind: input, shape index: {}]
  %s12 = inlined_call_operand.vmem [shape: f32[1,32], index: 12, kind: input, shape index: {}]
  %s13 = inlined_call_operand.hbm [shape: f32[2,32], index: 13, kind: output, shape index: {}]
  %s14 = sld [smem:[#allocation0]]
  $region62: #{tpu_custom_call.1} parent=0
    _
  %s16 = ssub.s32 1, %s14
  %s17 = scalar_select 0, %s16, %s14
  $region1: #{tpu_custom_call.1} parent=0
    #allocation2 [shape = 'u8[1024]{0}', space=vmem, size = 0x400, scoped, tag = 'output window, operand 0, single buffered']
    #allocation3 [shape = 's32[1]{0}', space=sflag, size = 0x4, scoped, tag = 'scoped memory for tpu_custom_call.1']
    %18 = vsyncpa [#allocation3], 0
    // Predicated region
    $region2: #{tpu_custom_call.1} parent=1 // pred_check
      _
    $region3: #{tpu_custom_call.1} parent=1 // pred_check_branch
      %20 = sbr.rel (0) target = $region5
    $region4: #{tpu_custom_call.1} parent=1 // pred_region
      _
    $region5: #{tpu_custom_call.1} parent=1 // pred_fallthru
      _
    // Predicated region
    $region6: #{tpu_custom_call.1} parent=1 // pred_check
      _
    $region7: #{tpu_custom_call.1} parent=1 // pred_check_branch
      %22 = sbr.rel (0) target = $region9
    $region8: #{tpu_custom_call.1} parent=1 // pred_region
      _
    $region9: #{tpu_custom_call.1} parent=1 // pred_fallthru
      _
    // Predicated region
    $region10: #{tpu_custom_call.1} parent=1 // pred_check
      _
    $region11: #{tpu_custom_call.1} parent=1 // pred_check_branch
      %24 = sbr.rel (0) target = $region13
    $region12: #{tpu_custom_call.1} parent=1 // pred_region
      _
    $region13: #{tpu_custom_call.1} parent=1 // pred_fallthru
      _
    // Predicated region
    $region14: #{tpu_custom_call.1} parent=1 // pred_check
      _
    $region15: #{tpu_custom_call.1} parent=1 // pred_check_branch
      %26 = sbr.rel (0) target = $region17
    $region16: #{tpu_custom_call.1} parent=1 // pred_region
      _
    $region17: #{tpu_custom_call.1} parent=1 // pred_fallthru
      _
    // Predicated region
    $region18: #{tpu_custom_call.1} parent=1 // pred_check
      _
    $region19: #{tpu_custom_call.1} parent=1 // pred_check_branch
      %28 = sbr.rel (0) target = $region21
    $region20: #{tpu_custom_call.1} parent=1 // pred_region
      _
    $region21: #{tpu_custom_call.1} parent=1 // pred_fallthru
      _
    // Predicated region
    $region22: #{tpu_custom_call.1} parent=1 // pred_check
      _
    $region23: #{tpu_custom_call.1} parent=1 // pred_check_branch
      %30 = sbr.rel (0) target = $region25
    $region24: #{tpu_custom_call.1} parent=1 // pred_region
      _
    $region25: #{tpu_custom_call.1} parent=1 // pred_fallthru
      _
    // Predicated region
    $region26: #{tpu_custom_call.1} parent=1 // pred_check
      _
    $region27: #{tpu_custom_call.1} parent=1 // pred_check_branch
      %32 = sbr.rel (0) target = $region29
    $region28: #{tpu_custom_call.1} parent=1 // pred_region
      _
    $region29: #{tpu_custom_call.1} parent=1 // pred_fallthru
      _
    // Predicated region
    $region30: #{tpu_custom_call.1} parent=1 // pred_check
      _
    $region31: #{tpu_custom_call.1} parent=1 // pred_check_branch
      %34 = sbr.rel (0) target = $region33
    $region32: #{tpu_custom_call.1} parent=1 // pred_region
      _
    $region33: #{tpu_custom_call.1} parent=1 // pred_fallthru
      _
    // Predicated region
    $region34: #{tpu_custom_call.1} parent=1 // pred_check
      _
    $region35: #{tpu_custom_call.1} parent=1 // pred_check_branch
      %36 = sbr.rel (0) target = $region37
    $region36: #{tpu_custom_call.1} parent=1 // pred_region
      _
    $region37: #{tpu_custom_call.1} parent=1 // pred_fallthru
      _
    // Predicated region
    $region38: #{tpu_custom_call.1} parent=1 // pred_check
      _
    $region39: #{tpu_custom_call.1} parent=1 // pred_check_branch
      %38 = sbr.rel (0) target = $region41
    $region40: #{tpu_custom_call.1} parent=1 // pred_region
      _
    $region41: #{tpu_custom_call.1} parent=1 // pred_fallthru
      _
    // Predicated region
    $region42: #{tpu_custom_call.1} parent=1 // pred_check
      _
    $region43: #{tpu_custom_call.1} parent=1 // pred_check_branch
      %40 = sbr.rel (0) target = $region45
    $region44: #{tpu_custom_call.1} parent=1 // pred_region
      _
    $region45: #{tpu_custom_call.1} parent=1 // pred_fallthru
      _
    // Predicated region
    $region46: #{tpu_custom_call.1} parent=1 // pred_check
      _
    $region47: #{tpu_custom_call.1} parent=1 // pred_check_branch
      %42 = sbr.rel (0) target = $region49
    $region48: #{tpu_custom_call.1} parent=1 // pred_region
      _
    $region49: #{tpu_custom_call.1} parent=1 // pred_fallthru
      _
    // Predicated region
    $region50: #{tpu_custom_call.1} parent=1 // pred_check
      _
    $region51: #{tpu_custom_call.1} parent=1 // pred_check_branch
      %44 = sbr.rel (0) target = $region53
    $region52: #{tpu_custom_call.1} parent=1 // pred_region
      _
    $region53: #{tpu_custom_call.1} parent=1 // pred_fallthru
      _
    %v46 = vld [vmem:[%s1] sm:$0x1]
    %v47 = vpack.c.bf16 %v46, %v46
    %v48 = vld [vmem:[%s3] sm:$0x1]
    %v49 = vld [vmem:[%s2] sm:$0xf]
    %v50 = vld [vmem:[%s2 + $0x4] sm:$0xf]
    %v51 = vld [vmem:[%s2 + $0x8] sm:$0xf]
    %v52 = vld [vmem:[%s2 + $0xc] sm:$0xf]
    %v53 = vld [vmem:[%s2 + $0x10] sm:$0xf]
    %v54 = vld [vmem:[%s2 + $0x14] sm:$0xf]
    %v55 = vld [vmem:[%s2 + $0x18] sm:$0xf]
    %v56 = vld [vmem:[%s2 + $0x1c] sm:$0xf]
    %v57 = vld [vmem:[%s2 + $0x20] sm:$0xf]
    %v58 = vld [vmem:[%s2 + $0x24] sm:$0xf]
    %v59 = vld [vmem:[%s2 + $0x28] sm:$0xf]
    %v60 = vld [vmem:[%s2 + $0x2c] sm:$0xf]
    %v73 = vunpack.c.l.b16 %v49
    %v74 = vunpack.c.l.b16 %v50
    %v75 = vunpack.c.l.b16 %v51
    %v76 = vunpack.c.l.b16 %v52
    %v77 = vunpack.c.l.b16 %v53
    %v78 = vunpack.c.l.b16 %v54
    %v79 = vunpack.c.l.b16 %v55
    %v80 = vunpack.c.l.b16 %v56
    %v81 = vunpack.c.l.b16 %v57
    %v82 = vunpack.c.l.b16 %v58
    %v83 = vunpack.c.l.b16 %v59
    %v84 = vunpack.c.l.b16 %v60
    %v85 = vpack.c.b16 %v74, %v73
    %v86 = vpack.c.b16 %v76, %v75
    %v87 = vpack.c.b16 %v78, %v77
    %v88 = vpack.c.b16 %v80, %v79
    %v89 = vpack.c.b16 %v82, %v81
    %v90 = vpack.c.b16 %v84, %v83
    %vm91 = vcmask 261120
    %v93 = vsel %vm91, %v47, 0
    %v96 = vsel %vm91, %v85, 0
    %v99 = vsel %vm91, %v86, 0
    %v102 = vsel %vm91, %v87, 0
    %v105 = vsel %vm91, %v88, 0
    %v108 = vsel %vm91, %v89, 0
    %v111 = vsel %vm91, %v90, 0
    %113 = vmatprep.subr.bf16.mxu0 0
    %114 = vmatpush1.bf16.xpose.msra.mxu0 0
    %115 = vmatprep.subr.bf16.mxu0 0
    %116 = vmatpush1.bf16.xpose.msra.mxu0 0
    %117 = vmatprep.subr.bf16.mxu0 0
    %118 = vmatpush1.bf16.xpose.msra.mxu0 %v111
    %119 = vmatprep.subr.bf16.mxu0 0
    %120 = vmatpush1.bf16.xpose.msra.mxu0 %v108
    %121 = vmatprep.subr.bf16.mxu0 0
    %122 = vmatpush1.bf16.xpose.msra.mxu0 %v105
    %123 = vmatprep.subr.bf16.mxu0 0
    %124 = vmatpush1.bf16.xpose.msra.mxu0 %v102
    %125 = vmatprep.subr.bf16.mxu0 0
    %126 = vmatpush1.bf16.xpose.msra.mxu0 %v99
    %127 = vmatprep.subr.bf16.mxu0 0
    %128 = vmatpush1.bf16.xpose.msra.mxu0 %v96
    %129 = vmatprep.subr.bf16.mxu0 0
    %130 = vmatpush2.bf16.xpose.msra.mxu0 0
    %131 = vmatprep.subr.bf16.mxu0 0
    %132 = vmatpush2.bf16.xpose.msra.mxu0 0
    %133 = vmatprep.subr.bf16.mxu0 0
    %134 = vmatpush2.bf16.xpose.msra.mxu0 0
    %135 = vmatprep.subr.bf16.mxu0 0
    %136 = vmatpush2.bf16.xpose.msra.mxu0 0
    %137 = vmatprep.subr.bf16.mxu0 0
    %138 = vmatpush2.bf16.xpose.msra.mxu0 0
    %139 = vmatprep.subr.bf16.mxu0 0
    %140 = vmatpush2.bf16.xpose.msra.mxu0 0
    %141 = vmatprep.subr.bf16.mxu0 0
    %142 = vmatpush2.bf16.xpose.msra.mxu0 0
    %143 = vmatprep.subr.bf16.mxu0 0
    %144 = vmatpush2.bf16.xpose.msra.mxu0 0
    %145 = vmatprep.mubr.bf16.mxu0 0
    %146 = vmatmul.mubr.bf16.gmra.mxu0 %v93
    %v147 = vpop.f32.mrf.mxu0
    %v148 = vadd.f32 %v48, %v147
    %v149 = vpop.f32.mrf.mxu0
    %v150 = vpop.f32.mrf.mxu0
    %v151 = vpop.f32.mrf.mxu0
    %152 = vdwg.mxu0
    %v153 = vmul.f32 %v148, 0.35355338
    %v154 = vld [vmem:[%s0] sm:$0xf]
    %v155 = vld [vmem:[%s0 + $0x4] sm:$0xf]
    %v157 = vlaneseq
    %v158 = vshrl.u32 %v157, 7
    %v159 = vsub.s32 0, %v158
    %v160 = vrot.slane %v48, %v159
    %v163 = vunpack.c.l.b16 %v154
    %v164 = vunpack.c.l.b16 %v155
    %v165 = vpack.c.b16 %v164, %v163
    %166 = vrot.lane.b32.xlu0 %v160, 96
    %v167 = vpop.permute.xlu0 %166
    %v170 = vsel %vm91, %v165, 0
    %172 = vmatprep.subr.bf16.mxu0 0
    %173 = vmatpush1.bf16.xpose.msra.mxu0 0
    %174 = vmatprep.subr.bf16.mxu0 0
    %175 = vmatpush1.bf16.xpose.msra.mxu0 0
    %176 = vmatprep.subr.bf16.mxu0 0
    %177 = vmatpush1.bf16.xpose.msra.mxu0 0
    %178 = vmatprep.subr.bf16.mxu0 0
    %179 = vmatpush1.bf16.xpose.msra.mxu0 0
    %180 = vmatprep.subr.bf16.mxu0 0
    %181 = vmatpush1.bf16.xpose.msra.mxu0 %v111
    %182 = vmatprep.subr.bf16.mxu0 0
    %183 = vmatpush1.bf16.xpose.msra.mxu0 %v108
    %184 = vmatprep.subr.bf16.mxu0 0
    %185 = vmatpush1.bf16.xpose.msra.mxu0 %v105
    %186 = vmatprep.subr.bf16.mxu0 0
    %187 = vmatpush1.bf16.xpose.msra.mxu0 %v102
    %188 = vmatprep.subr.bf16.mxu0 0
    %189 = vmatpush2.bf16.xpose.msra.mxu0 0
    %190 = vmatprep.subr.bf16.mxu0 0
    %191 = vmatpush2.bf16.xpose.msra.mxu0 0
    %192 = vmatprep.subr.bf16.mxu0 0
    %193 = vmatpush2.bf16.xpose.msra.mxu0 0
    %194 = vmatprep.subr.bf16.mxu0 0
    %195 = vmatpush2.bf16.xpose.msra.mxu0 0
    %196 = vmatprep.subr.bf16.mxu0 0
    %197 = vmatpush2.bf16.xpose.msra.mxu0 0
    %198 = vmatprep.subr.bf16.mxu0 0
    %199 = vmatpush2.bf16.xpose.msra.mxu0 0
    %200 = vmatprep.subr.bf16.mxu0 0
    %201 = vmatpush2.bf16.xpose.msra.mxu0 0
    %202 = vmatprep.subr.bf16.mxu0 0
    %203 = vmatpush2.bf16.xpose.msra.mxu0 0
    %204 = vmatprep.mubr.bf16.mxu0 0
    %205 = vmatmul.mubr.bf16.gmra.mxu0 %v170
    %v206 = vpop.f32.mrf.mxu0
    %v207 = vadd.f32 %v167, %v206
    %v208 = vpop.f32.mrf.mxu0
    %v209 = vpop.f32.mrf.mxu0
    %v210 = vadd.f32 %v167, %v209
    %v211 = vpop.f32.mrf.mxu0
    %212 = vdwg.mxu0
    %v213 = vld [vmem:[%s4] sm:$0xf]
    %v214 = vlaneseq
    %v215 = vshrl.u32 %v214, 7
    %v216 = vsub.s32 0, %v215
    %v217 = vrot.slane %v153, %v216
    %v218 = vmul.f32 %v213, %v217
    %v220 = vsel %vm91, %v207, 0
    %v223 = vsel %vm91, %v210, 0
    %v226 = vsel %vm91, %v218, 0
    %228 = vmatprep.subr.mxu0 0.0
    %229 = vmatpush1.xpose.msra.mxu0 0.0
    %230 = vmatprep.subr.mxu0 0.0
    %231 = vmatpush1.xpose.msra.mxu0 0.0
    %232 = vmatprep.subr.mxu0 0.0
    %233 = vmatpush1.xpose.msra.mxu0 0.0
    %234 = vmatprep.subr.mxu0 0.0
    %235 = vmatpush1.xpose.msra.mxu0 0.0
    %236 = vmatprep.subr.mxu0 0.0
    %237 = vmatpush1.xpose.msra.mxu0 0.0
    %238 = vmatprep.subr.mxu0 0.0
    %239 = vmatpush1.xpose.msra.mxu0 0.0
    %240 = vmatprep.subr.mxu0 0.0
    %241 = vmatpush1.xpose.msra.mxu0 0.0
    %242 = vmatprep.subr.mxu0 0.0
    %243 = vmatpush1.xpose.msra.mxu0 0.0
    %244 = vmatprep.subr.mxu0 0.0
    %245 = vmatpush1.xpose.msra.mxu0 0.0
    %246 = vmatprep.subr.mxu0 0.0
    %247 = vmatpush1.xpose.msra.mxu0 0.0
    %248 = vmatprep.subr.mxu0 0.0
    %249 = vmatpush1.xpose.msra.mxu0 0.0
    %250 = vmatprep.subr.mxu0 0.0
    %251 = vmatpush1.xpose.msra.mxu0 0.0
    %252 = vmatprep.subr.mxu0 0.0
    %253 = vmatpush1.xpose.msra.mxu0 0.0
    %254 = vmatprep.subr.mxu0 0.0
    %255 = vmatpush1.xpose.msra.mxu0 0.0
    %256 = vmatprep.subr.mxu0 0.0
    %257 = vmatpush1.xpose.msra.mxu0 0.0
    %258 = vmatprep.subr.mxu0 0.0
    %259 = vmatpush1.xpose.msra.mxu0 %v226
    %260 = vmatprep.subr.mxu0 0.0
    %261 = vmatpush2.xpose.msra.mxu0 0.0
    %262 = vmatprep.subr.mxu0 0.0
    %263 = vmatpush2.xpose.msra.mxu0 0.0
    %264 = vmatprep.subr.mxu0 0.0
    %265 = vmatpush2.xpose.msra.mxu0 0.0
    %266 = vmatprep.subr.mxu0 0.0
    %267 = vmatpush2.xpose.msra.mxu0 0.0
    %268 = vmatprep.subr.mxu0 0.0
    %269 = vmatpush2.xpose.msra.mxu0 0.0
    %270 = vmatprep.subr.mxu0 0.0
    %271 = vmatpush2.xpose.msra.mxu0 0.0
    %272 = vmatprep.subr.mxu0 0.0
    %273 = vmatpush2.xpose.msra.mxu0 0.0
    %274 = vmatprep.subr.mxu0 0.0
    %275 = vmatpush2.xpose.msra.mxu0 0.0
    %276 = vmatprep.subr.mxu0 0.0
    %277 = vmatpush2.xpose.msra.mxu0 0.0
    %278 = vmatprep.subr.mxu0 0.0
    %279 = vmatpush2.xpose.msra.mxu0 0.0
    %280 = vmatprep.subr.mxu0 0.0
    %281 = vmatpush2.xpose.msra.mxu0 0.0
    %282 = vmatprep.subr.mxu0 0.0
    %283 = vmatpush2.xpose.msra.mxu0 0.0
    %284 = vmatprep.subr.mxu0 0.0
    %285 = vmatpush2.xpose.msra.mxu0 0.0
    %286 = vmatprep.subr.mxu0 0.0
    %287 = vmatpush2.xpose.msra.mxu0 0.0
    %288 = vmatprep.subr.mxu0 0.0
    %289 = vmatpush2.xpose.msra.mxu0 0.0
    %290 = vmatprep.subr.mxu0 0.0
    %291 = vmatpush2.xpose.msra.mxu0 0.0
    %292 = vmatprep.mubr.f32.mxu0 0.0
    %293 = vmatmul.mubr.f32.gmra.mxu0 %v220
    %v294 = vpop.f32.mrf.mxu0
    %v295 = vadd.f32 0.0, %v294
    %v296 = vpop.f32.mrf.mxu0
    %297 = vmatprep.mubr.f32.mxu0 0.0
    %298 = vmatmul.mubr.f32.gmra.mxu0 %v223
    %v299 = vpop.f32.mrf.mxu0
    %v300 = vadd.f32 0.0, %v299
    %v301 = vpop.f32.mrf.mxu0
    %302 = vdwg.mxu0
    %304 = vrot.lane.b32.xlu0 %v148, 96
    %v305 = vpop.permute.xlu0 %304
    %v306 = vsel %vm91, %v305, 0
    %308 = vmatprep.subr.mxu0 0.0
    %309 = vmatpush1.xpose.msra.mxu0 0.0
    %310 = vmatprep.subr.mxu0 0.0
    %311 = vmatpush1.xpose.msra.mxu0 0.0
    %312 = vmatprep.subr.mxu0 0.0
    %313 = vmatpush1.xpose.msra.mxu0 0.0
    %314 = vmatprep.subr.mxu0 0.0
    %315 = vmatpush1.xpose.msra.mxu0 0.0
    %316 = vmatprep.subr.mxu0 0.0
    %317 = vmatpush1.xpose.msra.mxu0 0.0
    %318 = vmatprep.subr.mxu0 0.0
    %319 = vmatpush1.xpose.msra.mxu0 0.0
    %320 = vmatprep.subr.mxu0 0.0
    %321 = vmatpush1.xpose.msra.mxu0 0.0
    %322 = vmatprep.subr.mxu0 0.0
    %323 = vmatpush1.xpose.msra.mxu0 0.0
    %324 = vmatprep.subr.mxu0 0.0
    %325 = vmatpush1.xpose.msra.mxu0 0.0
    %326 = vmatprep.subr.mxu0 0.0
    %327 = vmatpush1.xpose.msra.mxu0 0.0
    %328 = vmatprep.subr.mxu0 0.0
    %329 = vmatpush1.xpose.msra.mxu0 0.0
    %330 = vmatprep.subr.mxu0 0.0
    %331 = vmatpush1.xpose.msra.mxu0 0.0
    %332 = vmatprep.subr.mxu0 0.0
    %333 = vmatpush1.xpose.msra.mxu0 0.0
    %334 = vmatprep.subr.mxu0 0.0
    %335 = vmatpush1.xpose.msra.mxu0 0.0
    %336 = vmatprep.subr.mxu0 0.0
    %337 = vmatpush1.xpose.msra.mxu0 0.0
    %338 = vmatprep.subr.mxu0 0.0
    %339 = vmatpush1.xpose.msra.mxu0 %v226
    %340 = vmatprep.subr.mxu0 0.0
    %341 = vmatpush2.xpose.msra.mxu0 0.0
    %342 = vmatprep.subr.mxu0 0.0
    %343 = vmatpush2.xpose.msra.mxu0 0.0
    %344 = vmatprep.subr.mxu0 0.0
    %345 = vmatpush2.xpose.msra.mxu0 0.0
    %346 = vmatprep.subr.mxu0 0.0
    %347 = vmatpush2.xpose.msra.mxu0 0.0
    %348 = vmatprep.subr.mxu0 0.0
    %349 = vmatpush2.xpose.msra.mxu0 0.0
    %350 = vmatprep.subr.mxu0 0.0
    %351 = vmatpush2.xpose.msra.mxu0 0.0
    %352 = vmatprep.subr.mxu0 0.0
    %353 = vmatpush2.xpose.msra.mxu0 0.0
    %354 = vmatprep.subr.mxu0 0.0
    %355 = vmatpush2.xpose.msra.mxu0 0.0
    %356 = vmatprep.subr.mxu0 0.0
    %357 = vmatpush2.xpose.msra.mxu0 0.0
    %358 = vmatprep.subr.mxu0 0.0
    %359 = vmatpush2.xpose.msra.mxu0 0.0
    %360 = vmatprep.subr.mxu0 0.0
    %361 = vmatpush2.xpose.msra.mxu0 0.0
    %362 = vmatprep.subr.mxu0 0.0
    %363 = vmatpush2.xpose.msra.mxu0 0.0
    %364 = vmatprep.subr.mxu0 0.0
    %365 = vmatpush2.xpose.msra.mxu0 0.0
    %366 = vmatprep.subr.mxu0 0.0
    %367 = vmatpush2.xpose.msra.mxu0 0.0
    %368 = vmatprep.subr.mxu0 0.0
    %369 = vmatpush2.xpose.msra.mxu0 0.0
    %370 = vmatprep.subr.mxu0 0.0
    %371 = vmatpush2.xpose.msra.mxu0 0.0
    %372 = vmatprep.mubr.f32.mxu0 0.0
    %373 = vmatmul.mubr.f32.gmra.mxu0 %v306
    %v374 = vpop.f32.mrf.mxu0
    %v375 = vadd.f32 0.0, %v374
    %v376 = vpop.f32.mrf.mxu0
    %377 = vdwg.mxu0
    %vm378 = vcmask 31744
    %v379 = vsel %vm378, %v295, -inf
    %v380 = vrot.slane %v379, 4
    %v381 = vmax.f32 %v379, %v380
    %v382 = vrot.slane %v381, 2
    %v383 = vmax.f32 %v381, %v382
    %v384 = vrot.slane %v383, 1
    %v385 = vmax.f32 %v383, %v384
    %v386 = vsel %vm378, %v300, -inf
    %v387 = vrot.slane %v386, 4
    %v388 = vmax.f32 %v386, %v387
    %v389 = vrot.slane %v388, 2
    %v390 = vmax.f32 %v388, %v389
    %v391 = vrot.slane %v390, 1
    %v392 = vmax.f32 %v390, %v391
    %v393 = vlaneseq
    %v394 = vshrl.u32 %v393, 7
    %v395 = vsub.s32 0, %v394
    %v396 = vrot.slane %v375, %v395
    %v397 = vmax.f32 %v385, %v396
    %v398 = vmax.f32 %v392, %v396
    %v399 = vlaneseq
    %v400 = vshrl.u32 %v399, 7
    %v401 = vsub.s32 0, %v400
    %v402 = vrot.slane %v397, %v401
    %v403 = vlaneseq
    %v404 = vshrl.u32 %v403, 7
    %v405 = vsub.s32 0, %v404
    %v406 = vrot.slane %v398, %v405
    %v407 = vsub.f32 %v295, %v402
    %v408 = vsub.f32 %v300, %v406
    %v409 = vmul.f32 %v407, 1.442695
    %v410 = vpow.pop %v409
    %v411 = vmul.f32 %v408, 1.442695
    %v412 = vpow.pop %v411
    %v415 = vrot.slane %v398, 7
    %vm416 = vcmask 1041409
    %v417 = vsel %vm416, %v415, %v397
    %v419 = vsub.f32 %v396, %v417
    %v420 = vmul.f32 %v419, 1.442695
    %v421 = vpow.pop %v420
    %v422 = vsel %vm378, %v410, 0.0
    %v423 = vrot.slane %v422, 4
    %v424 = vadd.f32 %v422, %v423
    %v425 = vrot.slane %v424, 2
    %v426 = vadd.f32 %v424, %v425
    %v427 = vrot.slane %v426, 1
    %v428 = vadd.f32 %v426, %v427
    %v429 = vsel %vm378, %v412, 0.0
    %v430 = vrot.slane %v429, 4
    %v431 = vadd.f32 %v429, %v430
    %v432 = vrot.slane %v431, 2
    %v433 = vadd.f32 %v431, %v432
    %v434 = vrot.slane %v433, 1
    %v435 = vadd.f32 %v433, %v434
    %v437 = vrot.slane %v421, 1
    %v440 = vadd.f32 %v428, %v421
    %v441 = vadd.f32 %v435, %v437
    %v442 = vrcp.pop %v440
    %v443 = vrcp.pop %v441
    %v444 = vlaneseq
    %v445 = vshrl.u32 %v444, 7
    %v446 = vsub.s32 0, %v445
    %v447 = vrot.slane %v442, %v446
    %v448 = vlaneseq
    %v449 = vshrl.u32 %v448, 7
    %v450 = vsub.s32 0, %v449
    %v451 = vrot.slane %v443, %v450
    %v452 = vmul.f32 %v410, %v447
    %v453 = vmul.f32 %v412, %v451
    %v456 = vrot.slane %v443, 7
    %v457 = vsel %vm416, %v456, %v442
    %v459 = vmul.f32 %v421, %v457
    %v461 = vsel %vm378, %v452, 0
    %v464 = vsel %vm378, %v453, 0
    %vm466 = vcmask 1043456
    %v468 = vsel %vm466, %v213, 0
    %470 = vmatprep.subr.mxu0 0.0
    %471 = vmatpush1.msra.mxu0 0.0
    %472 = vmatprep.subr.mxu0 0.0
    %473 = vmatpush1.msra.mxu0 0.0
    %474 = vmatprep.subr.mxu0 0.0
    %475 = vmatpush1.msra.mxu0 0.0
    %476 = vmatprep.subr.mxu0 0.0
    %477 = vmatpush1.msra.mxu0 0.0
    %478 = vmatprep.subr.mxu0 0.0
    %479 = vmatpush1.msra.mxu0 0.0
    %480 = vmatprep.subr.mxu0 0.0
    %481 = vmatpush1.msra.mxu0 0.0
    %482 = vmatprep.subr.mxu0 0.0
    %483 = vmatpush1.msra.mxu0 0.0
    %484 = vmatprep.subr.mxu0 0.0
    %485 = vmatpush1.msra.mxu0 0.0
    %486 = vmatprep.subr.mxu0 0.0
    %487 = vmatpush1.msra.mxu0 0.0
    %488 = vmatprep.subr.mxu0 0.0
    %489 = vmatpush1.msra.mxu0 0.0
    %490 = vmatprep.subr.mxu0 0.0
    %491 = vmatpush1.msra.mxu0 0.0
    %492 = vmatprep.subr.mxu0 0.0
    %493 = vmatpush1.msra.mxu0 0.0
    %494 = vmatprep.subr.mxu0 0.0
    %495 = vmatpush1.msra.mxu0 0.0
    %496 = vmatprep.subr.mxu0 0.0
    %497 = vmatpush1.msra.mxu0 0.0
    %498 = vmatprep.subr.mxu0 0.0
    %499 = vmatpush1.msra.mxu0 0.0
    %500 = vmatprep.subr.mxu0 0.0
    %501 = vmatpush1.msra.mxu0 %v468
    %502 = vmatprep.subr.mxu0 0.0
    %503 = vmatpush2.msra.mxu0 0.0
    %504 = vmatprep.subr.mxu0 0.0
    %505 = vmatpush2.msra.mxu0 0.0
    %506 = vmatprep.subr.mxu0 0.0
    %507 = vmatpush2.msra.mxu0 0.0
    %508 = vmatprep.subr.mxu0 0.0
    %509 = vmatpush2.msra.mxu0 0.0
    %510 = vmatprep.subr.mxu0 0.0
    %511 = vmatpush2.msra.mxu0 0.0
    %512 = vmatprep.subr.mxu0 0.0
    %513 = vmatpush2.msra.mxu0 0.0
    %514 = vmatprep.subr.mxu0 0.0
    %515 = vmatpush2.msra.mxu0 0.0
    %516 = vmatprep.subr.mxu0 0.0
    %517 = vmatpush2.msra.mxu0 0.0
    %518 = vmatprep.subr.mxu0 0.0
    %519 = vmatpush2.msra.mxu0 0.0
    %520 = vmatprep.subr.mxu0 0.0
    %521 = vmatpush2.msra.mxu0 0.0
    %522 = vmatprep.subr.mxu0 0.0
    %523 = vmatpush2.msra.mxu0 0.0
    %524 = vmatprep.subr.mxu0 0.0
    %525 = vmatpush2.msra.mxu0 0.0
    %526 = vmatprep.subr.mxu0 0.0
    %527 = vmatpush2.msra.mxu0 0.0
    %528 = vmatprep.subr.mxu0 0.0
    %529 = vmatpush2.msra.mxu0 0.0
    %530 = vmatprep.subr.mxu0 0.0
    %531 = vmatpush2.msra.mxu0 0.0
    %532 = vmatprep.subr.mxu0 0.0
    %533 = vmatpush2.msra.mxu0 0.0
    %534 = vmatprep.mubr.f32.mxu0 0.0
    %535 = vmatmul.mubr.f32.gmra.mxu0 %v461
    %v536 = vpop.f32.mrf.mxu0
    %v537 = vadd.f32 0.0, %v536
    %v538 = vpop.f32.mrf.mxu0
    %539 = vmatprep.mubr.f32.mxu0 0.0
    %540 = vmatmul.mubr.f32.gmra.mxu0 %v464
    %v541 = vpop.f32.mrf.mxu0
    %v542 = vadd.f32 0.0, %v541
    %v543 = vpop.f32.mrf.mxu0
    %544 = vdwg.mxu0
    %v546 = vsel %vm378, %v459, 0
    %548 = vmatprep.subr.mxu0 0.0
    %549 = vmatpush1.msra.mxu0 0.0
    %550 = vmatprep.subr.mxu0 0.0
    %551 = vmatpush1.msra.mxu0 0.0
    %552 = vmatprep.subr.mxu0 0.0
    %553 = vmatpush1.msra.mxu0 0.0
    %554 = vmatprep.subr.mxu0 0.0
    %555 = vmatpush1.msra.mxu0 0.0
    %556 = vmatprep.subr.mxu0 0.0
    %557 = vmatpush1.msra.mxu0 0.0
    %558 = vmatprep.subr.mxu0 0.0
    %559 = vmatpush1.msra.mxu0 0.0
    %560 = vmatprep.subr.mxu0 0.0
    %561 = vmatpush1.msra.mxu0 0.0
    %562 = vmatprep.subr.mxu0 0.0
    %563 = vmatpush1.msra.mxu0 0.0
    %564 = vmatprep.subr.mxu0 0.0
    %565 = vmatpush1.msra.mxu0 0.0
    %566 = vmatprep.subr.mxu0 0.0
    %567 = vmatpush1.msra.mxu0 0.0
    %568 = vmatprep.subr.mxu0 0.0
    %569 = vmatpush1.msra.mxu0 0.0
    %570 = vmatprep.subr.mxu0 0.0
    %571 = vmatpush1.msra.mxu0 0.0
    %572 = vmatprep.subr.mxu0 0.0
    %573 = vmatpush1.msra.mxu0 0.0
    %574 = vmatprep.subr.mxu0 0.0
    %575 = vmatpush1.msra.mxu0 0.0
    %576 = vmatprep.subr.mxu0 0.0
    %577 = vmatpush1.msra.mxu0 0.0
    %578 = vmatprep.subr.mxu0 0.0
    %579 = vmatpush1.msra.mxu0 %v468
    %580 = vmatprep.subr.mxu0 0.0
    %581 = vmatpush2.msra.mxu0 0.0
    %582 = vmatprep.subr.mxu0 0.0
    %583 = vmatpush2.msra.mxu0 0.0
    %584 = vmatprep.subr.mxu0 0.0
    %585 = vmatpush2.msra.mxu0 0.0
    %586 = vmatprep.subr.mxu0 0.0
    %587 = vmatpush2.msra.mxu0 0.0
    %588 = vmatprep.subr.mxu0 0.0
    %589 = vmatpush2.msra.mxu0 0.0
    %590 = vmatprep.subr.mxu0 0.0
    %591 = vmatpush2.msra.mxu0 0.0
    %592 = vmatprep.subr.mxu0 0.0
    %593 = vmatpush2.msra.mxu0 0.0
    %594 = vmatprep.subr.mxu0 0.0
    %595 = vmatpush2.msra.mxu0 0.0
    %596 = vmatprep.subr.mxu0 0.0
    %597 = vmatpush2.msra.mxu0 0.0
    %598 = vmatprep.subr.mxu0 0.0
    %599 = vmatpush2.msra.mxu0 0.0
    %600 = vmatprep.subr.mxu0 0.0
    %601 = vmatpush2.msra.mxu0 0.0
    %602 = vmatprep.subr.mxu0 0.0
    %603 = vmatpush2.msra.mxu0 0.0
    %604 = vmatprep.subr.mxu0 0.0
    %605 = vmatpush2.msra.mxu0 0.0
    %606 = vmatprep.subr.mxu0 0.0
    %607 = vmatpush2.msra.mxu0 0.0
    %608 = vmatprep.subr.mxu0 0.0
    %609 = vmatpush2.msra.mxu0 0.0
    %610 = vmatprep.subr.mxu0 0.0
    %611 = vmatpush2.msra.mxu0 0.0
    %612 = vmatprep.mubr.f32.mxu0 0.0
    %613 = vmatmul.mubr.f32.gmra.mxu0 %v546
    %v614 = vpop.f32.mrf.mxu0
    %v615 = vadd.f32 0.0, %v614
    %v616 = vpop.f32.mrf.mxu0
    %617 = vdwg.mxu0
    %618 = vrot.lane.b32.xlu0 %v207, 96
    %v619 = vpop.permute.xlu0 %618
    %620 = vrot.lane.b32.xlu0 %v210, 96
    %v621 = vpop.permute.xlu0 %620
    %v624 = vmul.f32 %v537, %v619
    %v625 = vmul.f32 %v542, %v621
    %v626 = vsel %vm91, %v624, 0.0
    %v627 = vrot.slane %v626, 4
    %v628 = vadd.f32 %v626, %v627
    %v629 = vrot.slane %v628, 2
    %v630 = vadd.f32 %v628, %v629
    %v631 = vrot.slane %v630, 1
    %v632 = vadd.f32 %v630, %v631
    %v633 = vsel %vm91, %v625, 0.0
    %v634 = vrot.slane %v633, 4
    %v635 = vadd.f32 %v633, %v634
    %v636 = vrot.slane %v635, 2
    %v637 = vadd.f32 %v635, %v636
    %v638 = vrot.slane %v637, 1
    %v639 = vadd.f32 %v637, %v638
    %v640 = vlaneseq
    %v641 = vshrl.u32 %v640, 7
    %v642 = vsub.s32 0, %v641
    %v643 = vrot.slane %v148, %v642
    %645 = vrot.lane.b32.xlu0 %v643, 64
    %v646 = vpop.permute.xlu0 %645
    %v648 = vmul.f32 %v615, %v646
    %v650 = vrot.slane %v648, 1
    %v653 = vadd.f32 %v632, %v648
    %v654 = vadd.f32 %v639, %v650
    %v655 = vpack.c.bf16 %v653, %v653
    %v656 = vpack.c.bf16 %v654, %v654
    %v657 = vld [vmem:[%s5] sm:$0xf]
    %v658 = vld [vmem:[%s5 + $0x4] sm:$0xf]
    %v659 = vld [vmem:[%s5 + $0x8] sm:$0xf]
    %v660 = vld [vmem:[%s5 + $0xc] sm:$0xf]
    %v661 = vld [vmem:[%s6] sm:$0x1]
    %v663 = vlaneseq
    %v664 = vshrl.u32 %v663, 7
    %v665 = vsub.s32 0, %v664
    %v666 = vrot.slane %v661, %v665
    %v670 = vunpack.c.l.b16 %v655
    %v671 = vunpack.c.l.b16 %v656
    %v672 = vrot.slane %v671, 7
    %v673 = vsel %vm416, %v672, %v670
    %v674 = vpack.c.b16 %v673, %v673
    %v679 = vunpack.c.l.b16 %v657
    %v680 = vunpack.c.l.b16 %v658
    %v681 = vunpack.c.l.b16 %v659
    %v682 = vunpack.c.l.b16 %v660
    %v683 = vpack.c.b16 %v680, %v679
    %v684 = vpack.c.b16 %v682, %v681
    %v686 = vsel %vm91, %v674, 0
    %v689 = vsel %vm91, %v683, 0
    %v692 = vsel %vm91, %v684, 0
    %694 = vmatprep.subr.bf16.mxu0 0
    %695 = vmatpush1.bf16.xpose.msra.mxu0 0
    %696 = vmatprep.subr.bf16.mxu0 0
    %697 = vmatpush1.bf16.xpose.msra.mxu0 0
    %698 = vmatprep.subr.bf16.mxu0 0
    %699 = vmatpush1.bf16.xpose.msra.mxu0 0
    %700 = vmatprep.subr.bf16.mxu0 0
    %701 = vmatpush1.bf16.xpose.msra.mxu0 0
    %702 = vmatprep.subr.bf16.mxu0 0
    %703 = vmatpush1.bf16.xpose.msra.mxu0 0
    %704 = vmatprep.subr.bf16.mxu0 0
    %705 = vmatpush1.bf16.xpose.msra.mxu0 0
    %706 = vmatprep.subr.bf16.mxu0 0
    %707 = vmatpush1.bf16.xpose.msra.mxu0 %v692
    %708 = vmatprep.subr.bf16.mxu0 0
    %709 = vmatpush1.bf16.xpose.msra.mxu0 %v689
    %710 = vmatprep.subr.bf16.mxu0 0
    %711 = vmatpush2.bf16.xpose.msra.mxu0 0
    %712 = vmatprep.subr.bf16.mxu0 0
    %713 = vmatpush2.bf16.xpose.msra.mxu0 0
    %714 = vmatprep.subr.bf16.mxu0 0
    %715 = vmatpush2.bf16.xpose.msra.mxu0 0
    %716 = vmatprep.subr.bf16.mxu0 0
    %717 = vmatpush2.bf16.xpose.msra.mxu0 0
    %718 = vmatprep.subr.bf16.mxu0 0
    %719 = vmatpush2.bf16.xpose.msra.mxu0 0
    %720 = vmatprep.subr.bf16.mxu0 0
    %721 = vmatpush2.bf16.xpose.msra.mxu0 0
    %722 = vmatprep.subr.bf16.mxu0 0
    %723 = vmatpush2.bf16.xpose.msra.mxu0 0
    %724 = vmatprep.subr.bf16.mxu0 0
    %725 = vmatpush2.bf16.xpose.msra.mxu0 0
    %726 = vmatprep.mubr.bf16.mxu0 0
    %727 = vmatmul.mubr.bf16.gmra.mxu0 %v686
    %v728 = vpop.f32.mrf.mxu0
    %v729 = vadd.f32 %v666, %v728
    %v730 = vpop.f32.mrf.mxu0
    %v731 = vpop.f32.mrf.mxu0
    %v732 = vpop.f32.mrf.mxu0
    %733 = vdwg.mxu0
    %v734 = vld [vmem:[%s7] sm:$0x1]
    %v735 = vld [vmem:[%s8] sm:$0x1]
    %v737 = vlaneseq
    %v738 = vshrl.u32 %v737, 7
    %v739 = vsub.s32 0, %v738
    %v740 = vrot.slane %v46, %v739
    %v742 = vadd.f32 %v740, %v729
    %vm743 = vcmask 254976
    %v744 = vsel %vm743, %v742, 0.0
    %745 = vadd.xlane.f32.xlu0 %v744
    %v746 = vpop.xlane.xlu0 %745
    %v747 = vrcp.pop 32.0
    %v748 = vmul.f32 %v746, %v747
    %v749 = vsub.f32 %v742, %v748
    %v750 = vmul.f32 %v749, %v749
    %v751 = vsel %vm743, %v750, 0.0
    %752 = vadd.xlane.f32.xlu0 %v751
    %v753 = vpop.xlane.xlu0 %752
    %v754 = vmul.f32 %v753, %v747
    %v755 = vadd.f32 %v754, 1e-05
    %v756 = vrsqrt.pop %v755
    %v757 = vmul.f32 %v749, %v756
    %v759 = vlaneseq
    %v760 = vshrl.u32 %v759, 7
    %v761 = vsub.s32 0, %v760
    %v762 = vrot.slane %v734, %v761
    %v764 = vmul.f32 %v757, %v762
    %v766 = vlaneseq
    %v767 = vshrl.u32 %v766, 7
    %v768 = vsub.s32 0, %v767
    %v769 = vrot.slane %v735, %v768
    %v771 = vadd.f32 %v764, %v769
    %v772 = vpack.c.bf16 %v771, %v771
    %v773 = vld [vmem:[%s9] sm:$0xf]
    %v774 = vld [vmem:[%s9 + $0x4] sm:$0xf]
    %v775 = vld [vmem:[%s9 + $0x8] sm:$0xf]
    %v776 = vld [vmem:[%s9 + $0xc] sm:$0xf]
    %v777 = vld [vmem:[%s9 + $0x10] sm:$0xf]
    %v778 = vld [vmem:[%s9 + $0x14] sm:$0xf]
    %v779 = vld [vmem:[%s9 + $0x18] sm:$0xf]
    %v780 = vld [vmem:[%s9 + $0x1c] sm:$0xf]
    %v781 = vld [vmem:[%s9 + $0x20] sm:$0xf]
    %v782 = vld [vmem:[%s9 + $0x24] sm:$0xf]
    %v783 = vld [vmem:[%s9 + $0x28] sm:$0xf]
    %v784 = vld [vmem:[%s9 + $0x2c] sm:$0xf]
    %v785 = vld [vmem:[%s9 + $0x30] sm:$0xf]
    %v786 = vld [vmem:[%s9 + $0x34] sm:$0xf]
    %v787 = vld [vmem:[%s9 + $0x38] sm:$0xf]
    %v788 = vld [vmem:[%s9 + $0x3c] sm:$0xf]
    %v789 = vld [vmem:[%s10] sm:$0x1]
    %v791 = vlaneseq
    %v792 = vshrl.u32 %v791, 7
    %v793 = vsub.s32 0, %v792
    %v794 = vrot.slane %v789, %v793
    %v812 = vunpack.c.l.b16 %v773
    %v813 = vunpack.c.l.b16 %v774
    %v814 = vunpack.c.l.b16 %v775
    %v815 = vunpack.c.l.b16 %v776
    %v816 = vunpack.c.l.b16 %v777
    %v817 = vunpack.c.l.b16 %v778
    %v818 = vunpack.c.l.b16 %v779
    %v819 = vunpack.c.l.b16 %v780
    %v820 = vunpack.c.l.b16 %v781
    %v821 = vunpack.c.l.b16 %v782
    %v822 = vunpack.c.l.b16 %v783
    %v823 = vunpack.c.l.b16 %v784
    %v824 = vunpack.c.l.b16 %v785
    %v825 = vunpack.c.l.b16 %v786
    %v826 = vunpack.c.l.b16 %v787
    %v827 = vunpack.c.l.b16 %v788
    %v828 = vpack.c.b16 %v813, %v812
    %v829 = vpack.c.b16 %v815, %v814
    %v830 = vpack.c.b16 %v817, %v816
    %v831 = vpack.c.b16 %v819, %v818
    %v832 = vpack.c.b16 %v821, %v820
    %v833 = vpack.c.b16 %v823, %v822
    %v834 = vpack.c.b16 %v825, %v824
    %v835 = vpack.c.b16 %v827, %v826
    %v837 = vsel %vm91, %v772, 0
    %v840 = vsel %vm91, %v828, 0
    %v843 = vsel %vm91, %v829, 0
    %v846 = vsel %vm91, %v830, 0
    %v849 = vsel %vm91, %v831, 0
    %v852 = vsel %vm91, %v832, 0
    %v855 = vsel %vm91, %v833, 0
    %v858 = vsel %vm91, %v834, 0
    %v861 = vsel %vm91, %v835, 0
    %863 = vmatprep.subr.bf16.mxu0 0
    %864 = vmatpush1.bf16.xpose.msra.mxu0 %v861
    %865 = vmatprep.subr.bf16.mxu0 0
    %866 = vmatpush1.bf16.xpose.msra.mxu0 %v858
    %867 = vmatprep.subr.bf16.mxu0 0
    %868 = vmatpush1.bf16.xpose.msra.mxu0 %v855
    %869 = vmatprep.subr.bf16.mxu0 0
    %870 = vmatpush1.bf16.xpose.msra.mxu0 %v852
    %871 = vmatprep.subr.bf16.mxu0 0
    %872 = vmatpush1.bf16.xpose.msra.mxu0 %v849
    %873 = vmatprep.subr.bf16.mxu0 0
    %874 = vmatpush1.bf16.xpose.msra.mxu0 %v846
    %875 = vmatprep.subr.bf16.mxu0 0
    %876 = vmatpush1.bf16.xpose.msra.mxu0 %v843
    %877 = vmatprep.subr.bf16.mxu0 0
    %878 = vmatpush1.bf16.xpose.msra.mxu0 %v840
    %879 = vmatprep.subr.bf16.mxu0 0
    %880 = vmatpush2.bf16.xpose.msra.mxu0 0
    %881 = vmatprep.subr.bf16.mxu0 0
    %882 = vmatpush2.bf16.xpose.msra.mxu0 0
    %883 = vmatprep.subr.bf16.mxu0 0
    %884 = vmatpush2.bf16.xpose.msra.mxu0 0
    %885 = vmatprep.subr.bf16.mxu0 0
    %886 = vmatpush2.bf16.xpose.msra.mxu0 0
    %887 = vmatprep.subr.bf16.mxu0 0
    %888 = vmatpush2.bf16.xpose.msra.mxu0 0
    %889 = vmatprep.subr.bf16.mxu0 0
    %890 = vmatpush2.bf16.xpose.msra.mxu0 0
    %891 = vmatprep.subr.bf16.mxu0 0
    %892 = vmatpush2.bf16.xpose.msra.mxu0 0
    %893 = vmatprep.subr.bf16.mxu0 0
    %894 = vmatpush2.bf16.xpose.msra.mxu0 0
    %895 = vmatprep.mubr.bf16.mxu0 0
    %896 = vmatmul.mubr.bf16.gmra.mxu0 %v837
    %v897 = vpop.f32.mrf.mxu0
    %v898 = vadd.f32 %v794, %v897
    %v899 = vpop.f32.mrf.mxu0
    %v900 = vpop.f32.mrf.mxu0
    %v901 = vpop.f32.mrf.mxu0
    %902 = vdwg.mxu0
    %v903 = vmul.f32 %v898, 0.5
    %v904 = vmul.f32 %v898, 0.044715
    %v905 = vmul.f32 %v904, %v898
    %v906 = vmul.f32 %v905, %v898
    %v907 = vadd.f32 %v898, %v906
    %v908 = vmul.f32 %v907, 0.7978846
    %v909 = vtanh.pop %v908
    %v910 = vadd.f32 %v909, 1.0
    %v911 = vmul.f32 %v903, %v910
    %v912 = vpack.c.bf16 %v911, %v911
    %v913 = vld [vmem:[%s11] sm:$0xf]
    %v914 = vld [vmem:[%s11 + $0x4] sm:$0xf]
    %v915 = vld [vmem:[%s11 + $0x8] sm:$0xf]
    %v916 = vld [vmem:[%s11 + $0xc] sm:$0xf]
    %v917 = vld [vmem:[%s12] sm:$0x1]
    %v919 = vlaneseq
    %v920 = vshrl.u32 %v919, 7
    %v921 = vsub.s32 0, %v920
    %v922 = vrot.slane %v917, %v921
    %v928 = vunpack.c.l.b16 %v913
    %v929 = vunpack.c.l.b16 %v914
    %v930 = vunpack.c.l.b16 %v915
    %v931 = vunpack.c.l.b16 %v916
    %v932 = vpack.c.b16 %v929, %v928
    %v933 = vpack.c.b16 %v931, %v930
    %936 = vmatprep.subr.bf16.mxu0 0
    %937 = vmatpush1.bf16.xpose.msra.mxu0 0
    %938 = vmatprep.subr.bf16.mxu0 0
    %939 = vmatpush1.bf16.xpose.msra.mxu0 0
    %940 = vmatprep.subr.bf16.mxu0 0
    %941 = vmatpush1.bf16.xpose.msra.mxu0 0
    %942 = vmatprep.subr.bf16.mxu0 0
    %943 = vmatpush1.bf16.xpose.msra.mxu0 0
    %944 = vmatprep.subr.bf16.mxu0 0
    %945 = vmatpush1.bf16.xpose.msra.mxu0 0
    %946 = vmatprep.subr.bf16.mxu0 0
    %947 = vmatpush1.bf16.xpose.msra.mxu0 0
    %948 = vmatprep.subr.bf16.mxu0 0
    %949 = vmatpush1.bf16.xpose.msra.mxu0 %v933
    %950 = vmatprep.subr.bf16.mxu0 0
    %951 = vmatpush1.bf16.xpose.msra.mxu0 %v932
    %952 = vmatprep.subr.bf16.mxu0 0
    %953 = vmatpush2.bf16.xpose.msra.mxu0 0
    %954 = vmatprep.subr.bf16.mxu0 0
    %955 = vmatpush2.bf16.xpose.msra.mxu0 0
    %956 = vmatprep.subr.bf16.mxu0 0
    %957 = vmatpush2.bf16.xpose.msra.mxu0 0
    %958 = vmatprep.subr.bf16.mxu0 0
    %959 = vmatpush2.bf16.xpose.msra.mxu0 0
    %960 = vmatprep.subr.bf16.mxu0 0
    %961 = vmatpush2.bf16.xpose.msra.mxu0 0
    %962 = vmatprep.subr.bf16.mxu0 0
    %963 = vmatpush2.bf16.xpose.msra.mxu0 0
    %964 = vmatprep.subr.bf16.mxu0 0
    %965 = vmatpush2.bf16.xpose.msra.mxu0 0
    %966 = vmatprep.subr.bf16.mxu0 0
    %967 = vmatpush2.bf16.xpose.msra.mxu0 0
    %968 = vmatprep.mubr.bf16.mxu0 0
    %969 = vmatmul.mubr.bf16.gmra.mxu0 %v912
    %v970 = vpop.f32.mrf.mxu0
    %v971 = vadd.f32 %v922, %v970
    %v972 = vpop.f32.mrf.mxu0
    %v973 = vpop.f32.mrf.mxu0
    %v974 = vpop.f32.mrf.mxu0
    %975 = vdwg.mxu0
    %v976 = vadd.f32 %v771, %v971
    %v977 = vsel %vm743, %v976, 0.0
    %978 = vadd.xlane.f32.xlu0 %v977
    %v979 = vpop.xlane.xlu0 %978
    %v980 = vmul.f32 %v979, %v747
    %v981 = vsub.f32 %v976, %v980
    %v982 = vmul.f32 %v981, %v981
    %v983 = vsel %vm743, %v982, 0.0
    %984 = vadd.xlane.f32.xlu0 %v983
    %v985 = vpop.xlane.xlu0 %984
    %v986 = vmul.f32 %v985, %v747
    %v987 = vadd.f32 %v986, 1e-05
    %v988 = vrsqrt.pop %v987
    %v989 = vmul.f32 %v981, %v988
    %v990 = vmul.f32 %v989, %v762
    %v991 = vadd.f32 %v990, %v769
    %992 = vst.msk [vmem:[#allocation2] sm:$0x3] %vm743, %v991
    // Predicated region
    $region54: #{tpu_custom_call.1} parent=1 // pred_check
      _
    $region55: #{tpu_custom_call.1} parent=1 // pred_check_branch
      %994 = sbr.rel (0) target = $region57
    $region56: #{tpu_custom_call.1} parent=1 // pred_region
      %s996 = ssub.s32 32, 32
      %997 = vsyncadd [#allocation3], %s996
      %s999 = sshll.u32 [#allocation2], 4
      %s1000 = int_to_ptr.vmem [resolvable:$true] %s999
      %1002 = dma.vmem_to_hbm [thread:$0]  %s1000, 32, %s13, [#allocation3]
    $region57: #{tpu_custom_call.1} parent=1 // pred_fallthru
      _
    // Predicated region
    $region58: #{tpu_custom_call.1} parent=1 // pred_check
      _
    $region59: #{tpu_custom_call.1} parent=1 // pred_check_branch
      %1004 = sbr.rel (0) target = $region61
    $region60: #{tpu_custom_call.1} parent=1 // pred_region
      %1005 = dma.done [#allocation3], 32
    $region61: #{tpu_custom_call.1} parent=1 // pred_fallthru
      _
    %1006 = vsyncpa [#allocation3], 1

</llo_original>
